<compile_context>
chip_gen: v7x
topology: tpu7x:2x2x1
jax: 0.10.0
libtpu: 0.0.40
codegen_flags: <defaults>
</compile_context>

<pallas_src>
import functools
import math

import jax
import jax.numpy as jnp
from jax import lax
from jax.experimental import pallas as pl
from jax.experimental.pallas import tpu as pltpu


# -----------------------------------------------------------------------------
# Helpers
# -----------------------------------------------------------------------------

def _min_const(dtype):
    """Identity element for `max` of the given dtype."""
    dtype = jnp.dtype(dtype)
    if jnp.issubdtype(dtype, jnp.floating):
        return dtype.type(-jnp.inf)
    if jnp.issubdtype(dtype, jnp.integer):
        return dtype.type(jnp.iinfo(dtype).min)
    if dtype == jnp.bool_:
        return dtype.type(False)
    raise NotImplementedError(f"max_pool: unsupported dtype {dtype}")


def _sublane_multiple(dtype):
    # Min second-to-last block dim: 8 (32-bit), 16 (16-bit), 32 (8-bit).
    return max(8, 32 // jnp.dtype(dtype).itemsize)


def _default_per_buffer_bytes():
    """Per-input-buffer VMEM budget, generation aware (v7x has 64 MiB VMEM)."""
    try:
        cap = int(getattr(pltpu.get_tpu_info(), "vmem_capacity_bytes", 64 << 20))
    except Exception:
        cap = 64 << 20
    return int(min(12 << 20, max(2 << 20, cap // 8)))


def _vmem_limit_bytes(in_block_bytes, out_block_bytes):
    # 2x input (double buffered) + 1x input-sized masking temporary +
    # 2x output (double buffered) + slack for small temporaries / scratch.
    need = 3 * in_block_bytes + 2 * out_block_bytes + (2 << 20)
    if need <= (16 << 20):
        return None                       # default scoped limit is enough
    return int(need + (4 << 20))          # always >= need; <= ~45 MiB in practice


# -----------------------------------------------------------------------------
# Tile pickers
# -----------------------------------------------------------------------------

def _mid_tiles(B, N, C, dtype, budget):
    """Tiles for reducing axis 1 of (B, N, C): returns (TB, tn, tc)."""
    item = jnp.dtype(dtype).itemsize
    sub = _sublane_multiple(dtype)

    def tn_cap(tb, tc):
        return (budget // max(1, tb * tc * item)) // sub * sub

    # Batch tile: small & output-aligned; put the VMEM budget into tn.
    TB = B if B <= 64 else 64
    n_target = min(512, N)
    if B > sub and TB > sub and tn_cap(TB, C) < n_target:
        TB = sub

    # Feature tile: full C unless even a minimum-height block busts the budget.
    tc = C
    if C > 128 and tn_cap(TB, tc) < sub:
        tc = (budget // max(1, TB * sub * item)) // 128 * 128
        tc = max(128, min(tc, C))

    cap = tn_cap(TB, tc)
    tn = N if cap >= N else max(sub, cap)
    return TB, tn, tc


def _last_tiles(B, N, dtype, budget):
    """Tiles for reducing the last (lane) axis of (B, N): returns (TB, tn)."""
    item = jnp.dtype(dtype).itemsize
    sub = _sublane_multiple(dtype)

    TB = B if B <= 256 else 256
    cap = (budget // max(1, TB * item)) // 128 * 128
    if cap < 128 and B > sub:
        TB = sub
        cap = (budget // max(1, TB * item)) // 128 * 128
    cap = max(128, cap)
    tn = N if N <= cap else cap
    return TB, tn


# -----------------------------------------------------------------------------
# Kernels
# -----------------------------------------------------------------------------

def _maxpool_mid_kernel(x_ref, o_ref, *, tn, n_valid, n_blocks, n_inner):
    """Reduce axis 1 of a (TB, tn, tc) block into a resident (1, TB, tc) acc."""
    h = pl.program_id(0)
    n = pl.program_id(3)

    @pl.when(n == 0)
    def _():
        o_ref[...] = jnp.full(o_ref.shape, _min_const(o_ref.dtype), o_ref.dtype)

    nb = jnp.minimum(h * n_inner + n, n_blocks - 1)   # global reduction block

    def _acc(vals):
        o_ref[0] = jnp.maximum(o_ref[0], jnp.max(vals, axis=1))

    if n_valid % tn != 0:
        # Last reduction block is partial: mask the tail with the max-identity.
        @pl.when(nb == n_blocks - 1)
        def _():
            i = lax.broadcasted_iota(jnp.int32, x_ref.shape, 1)
            _acc(jnp.where(nb * tn + i < n_valid, x_ref[...],
                           _min_const(x_ref.dtype)))

        @pl.when(nb != n_blocks - 1)
        def _():
            _acc(x_ref[...])
    else:
        _acc(x_ref[...])


def _maxpool_last_kernel(x_ref, o_ref, *, tn, n_valid, n_blocks, n_inner):
    """Reduce the lane axis of a (TB, tn) block into a resident (1, TB, 1) acc."""
    h = pl.program_id(0)
    n = pl.program_id(2)

    @pl.when(n == 0)
    def _():
        o_ref[...] = jnp.full(o_ref.shape, _min_const(o_ref.dtype), o_ref.dtype)

    nb = jnp.minimum(h * n_inner + n, n_blocks - 1)

    def _acc(vals):
        o_ref[0] = jnp.maximum(o_ref[0], jnp.max(vals, axis=1, keepdims=True))

    if n_valid % tn != 0:
        @pl.when(nb == n_blocks - 1)
        def _():
            i = lax.broadcasted_iota(jnp.int32, x_ref.shape, 1)
            _acc(jnp.where(nb * tn + i < n_valid, x_ref[...],
                           _min_const(x_ref.dtype)))

        @pl.when(nb != n_blocks - 1)
        def _():
            _acc(x_ref[...])
    else:
        _acc(x_ref[...])


# -----------------------------------------------------------------------------
# pallas_call wrappers
# -----------------------------------------------------------------------------

def _maxpool_mid(x3, budget):
    """Max over axis 1 of (B, N, C) -> (B, C)."""
    B, N, C = x3.shape
    dtype = x3.dtype
    item = jnp.dtype(dtype).itemsize

    TB, tn, tc = _mid_tiles(B, N, C, dtype, budget)
    bb = pl.cdiv(B, TB)
    cb = pl.cdiv(C, tc)
    n_blocks = pl.cdiv(N, tn)

    # Guarantee >= 2 steps on a parallel axis (keeps v7x's 2nd TC busy) by
    # splitting the reduction into two halves accumulated into partials.
    n_split = 2 if (bb * cb == 1 and n_blocks >= 2) else 1
    n_inner = pl.cdiv(n_blocks, n_split)

    vmem_limit = _vmem_limit_bytes(TB * tn * tc * item, TB * tc * item)

    kernel = functools.partial(_maxpool_mid_kernel, tn=tn, n_valid=N,
                               n_blocks=n_blocks, n_inner=n_inner)

    out = pl.pallas_call(
        kernel,
        out_shape=jax.ShapeDtypeStruct((n_split, B, C), dtype),
        grid_spec=pltpu.PrefetchScalarGridSpec(
            num_scalar_prefetch=0,
            grid=(n_split, bb, cb, n_inner),
            in_specs=[pl.BlockSpec(
                (TB, tn, tc),
                lambda h, b, c, n: (b, jnp.minimum(h * n_inner + n,
                                                   n_blocks - 1), c))],
            out_specs=pl.BlockSpec((1, TB, tc), lambda h, b, c, n: (h, b, c)),
        ),
        compiler_params=pltpu.CompilerParams(
            dimension_semantics=("parallel", "parallel", "parallel", "arbitrary"),
            vmem_limit_bytes=vmem_limit),
    )(x3)

    if n_split == 1:
        return out[0]
    return jnp.max(out, axis=0)


def _maxpool_last(x2, budget):
    """Max over the last (lane) axis of (B, N) -> (B,)."""
    B, N = x2.shape
    dtype = x2.dtype
    item = jnp.dtype(dtype).itemsize

    TB, tn = _last_tiles(B, N, dtype, budget)
    bb = pl.cdiv(B, TB)
    n_blocks = pl.cdiv(N, tn)
    n_split = 2 if (bb == 1 and n_blocks >= 2) else 1
    n_inner = pl.cdiv(n_blocks, n_split)

    vmem_limit = _vmem_limit_bytes(TB * tn * item, TB * item)

    kernel = functools.partial(_maxpool_last_kernel, tn=tn, n_valid=N,
                               n_blocks=n_blocks, n_inner=n_inner)

    out = pl.pallas_call(
        kernel,
        out_shape=jax.ShapeDtypeStruct((n_split, B, 1), dtype),
        grid_spec=pltpu.PrefetchScalarGridSpec(
            num_scalar_prefetch=0,
            grid=(n_split, bb, n_inner),
            in_specs=[pl.BlockSpec(
                (TB, tn),
                lambda h, b, n: (b, jnp.minimum(h * n_inner + n, n_blocks - 1)))],
            out_specs=pl.BlockSpec((1, TB, 1), lambda h, b, n: (h, b, 0)),
        ),
        compiler_params=pltpu.CompilerParams(
            dimension_semantics=("parallel", "parallel", "arbitrary"),
            vmem_limit_bytes=vmem_limit),
    )(x2)

    out = jnp.max(out, axis=0) if n_split == 2 else out[0]
    return out[:, 0]


# -----------------------------------------------------------------------------
# Public wrapper: torch `x.max(dim)[0]` semantics
# -----------------------------------------------------------------------------

@functools.partial(jax.jit, static_argnames=("dim", "per_buffer_bytes"))
def _max_pool_jit(x, dim, per_buffer_bytes):
    ndim = x.ndim
    dim = dim % ndim
    shape = x.shape
    if shape[dim] == 0:
        raise ValueError("max_pool: cannot reduce an empty axis")

    if dim == ndim - 1:
        lead = shape[:-1]
        B = math.prod(lead)
        if B == 0:
            return jnp.zeros(lead, x.dtype)
        out = _maxpool_last(x.reshape(B, shape[-1]), per_buffer_bytes)
        return out.reshape(lead)

    lead, trail = shape[:dim], shape[dim + 1:]
    B = math.prod(lead)
    C = math.prod(trail)
    N = shape[dim]
    if B * C == 0:
        return jnp.zeros(lead + trail, x.dtype)

    x3 = x.reshape(B, N, C)

    # Lane-fold narrow feature dims: (B, N, C) -> (B, N//g, g*C). Free,
    # contiguous reshape; restores 128-lane utilisation for C < 128.
    g = 1
    if C < 128:
        for cand in range(min(128 // max(C, 1), N), 1, -1):
            if N % cand == 0:
                g = cand
                break
    if g > 1:
        out = _maxpool_mid(x3.reshape(B, N // g, g * C), per_buffer_bytes)
        out = jnp.max(out.reshape(B, g, C), axis=1)
    else:
        out = _maxpool_mid(x3, per_buffer_bytes)
    return out.reshape(lead + trail)


def max_pool(x, dim: int, per_buffer_bytes: int | None = None):
    """Equivalent of torch `x.max(dim)[0]` (values only; indices discarded)."""
    if per_buffer_bytes is None:
        per_buffer_bytes = _default_per_buffer_bytes()
    return _max_pool_jit(x, dim=dim, per_buffer_bytes=int(per_buffer_bytes))


if __name__ == "__main__":
    key = jax.random.PRNGKey(0)
    keys = jax.random.split(key, 8)

    # 1) DP3 point-cloud usage: (batch, num_points, channels), MaxPool(dim=1).
    #    Exercises the narrow-C lane-folding path (C=32 -> folded to 128 lanes).
    x1 = jax.random.normal(keys[0], (2, 16, 32), dtype=jnp.float32)
    y1 = max_pool(x1, dim=1)
    assert y1.shape == (2, 32)
    assert jnp.allclose(y1, jnp.max(x1, axis=1))

    # 2) Multi-block reduction + in-kernel tail mask + 2-way parallel split
    #    (tiny VMEM budget forces tn=16 over N=23; 23 is prime -> no fold).
    x2 = jax.random.normal(keys[1], (2, 23, 32), dtype=jnp.float32)
    y2 = max_pool(x2, dim=1, per_buffer_bytes=4096)
    assert jnp.allclose(y2, jnp.max(x2, axis=1))

    # 3) bf16 (16-sublane packing path).
    x3 = jax.random.normal(keys[2], (2, 16, 32), dtype=jnp.bfloat16)
    y3 = max_pool(x3, dim=1)
    assert jnp.array_equal(y3, jnp.max(x3, axis=1))

    # 4) Reduce a middle axis of a 4-D tensor (trailing dims folded onto lanes).
    x4 = jax.random.normal(keys[3], (2, 5, 7, 6), dtype=jnp.float32)
    y4 = max_pool(x4, dim=2)
    assert y4.shape == (2, 5, 6)
    assert jnp.allclose(y4, jnp.max(x4, axis=2))

    # 5) Last-axis reduction (lane-reduce kernel, single block).
    x5 = jax.random.normal(keys[4], (3, 40), dtype=jnp.float32)
    y5 = max_pool(x5, dim=-1)
    assert jnp.allclose(y5, jnp.max(x5, axis=-1))

    # 6) Integer dtype, last axis, multi-block with tail mask + parallel split.
    x6 = jax.random.randint(keys[5], (4, 300), -1000, 1000, dtype=jnp.int32)
    y6 = max_pool(x6, dim=1, per_buffer_bytes=2048)
    assert jnp.array_equal(y6, jnp.max(x6, axis=1))

    # 7) Wide feature dim (no lane-folding), full-N single block.
    x7 = jax.random.normal(keys[6], (3, 50, 200), dtype=jnp.float32)
    y7 = max_pool(x7, dim=1)
    assert jnp.allclose(y7, jnp.max(x7, axis=1))

    # 8) Batch larger than the batch tile (partial-B output blocks) + folding.
    x8 = jax.random.normal(keys[7], (70, 33, 8), dtype=jnp.float32)
    y8 = max_pool(x8, dim=1)
    assert y8.shape == (70, 8)
    assert jnp.allclose(y8, jnp.max(x8, axis=1))

    jax.block_until_ready((y1, y2, y3, y4, y5, y6, y7, y8))
    print("KERNEL_OK")
</pallas_src>

<mosaic_0001>
module attributes {stable_mosaic.version = 11 : i64} {
  func.func @_maxpool_mid_kernel(%arg0: i32, %arg1: i32, %arg2: i32, %arg3: i32, %arg4: memref<2x4x128xf32, #tpu.memory_space<vmem>>, %arg5: memref<1x2x128xf32, #tpu.memory_space<vmem>>) attributes {dimension_semantics = [#tpu.dimension_semantics<parallel>, #tpu.dimension_semantics<parallel>, #tpu.dimension_semantics<parallel>, #tpu.dimension_semantics<arbitrary>], iteration_bounds = array<i64: 1, 1, 1, 1>, scalar_prefetch = 0 : i64, scratch_operands = 0 : i64, tpu.core_type = #tpu.core_type<tc>, window_params = [{transform_indices = @transform_0, window_bounds = array<i64: 2, 4, 128>}, {transform_indices = @transform_1, window_bounds = array<i64: 1, 2, 128>}]} {
    %c0_i32 = arith.constant 0 : i32
    %0 = arith.cmpi eq, %arg3, %c0_i32 : i32
    %1 = arith.extui %0 : i1 to i32
    %c0_i32_0 = arith.constant 0 : i32
    %2 = arith.cmpi ne, %1, %c0_i32_0 : i32
    scf.if %2 {
      %cst_9 = arith.constant 0xFF800000 : f32
      %11 = vector.broadcast %cst_9 : f32 to vector<1x2x128xf32>
      %c0_10 = arith.constant 0 : index
      %c0_11 = arith.constant 0 : index
      %c0_12 = arith.constant 0 : index
      %12 = vector.load %arg5[%c0_10, %c0_11, %c0_12] : memref<1x2x128xf32, #tpu.memory_space<vmem>>, vector<1x2x128xf32>
      tpu.vector_store %arg5[%c0_10, %c0_11, %c0_12], %11 {strides = array<i32>} : memref<1x2x128xf32, #tpu.memory_space<vmem>>, vector<1x2x128xf32>,
    } else {
    }
    %c0 = arith.constant 0 : index
    %c0_1 = arith.constant 0 : index
    %c0_2 = arith.constant 0 : index
    %3 = vector.load %arg4[%c0, %c0_1, %c0_2] : memref<2x4x128xf32, #tpu.memory_space<vmem>>, vector<2x4x128xf32>
    %c0_3 = arith.constant 0 : index
    %c0_4 = arith.constant 0 : index
    %c0_5 = arith.constant 0 : index
    %4 = vector.load %arg5[%c0_3, %c0_4, %c0_5] : memref<1x2x128xf32, #tpu.memory_space<vmem>>, vector<1x2x128xf32>
    %5 = vector.shape_cast %4 : vector<1x2x128xf32> to vector<2x128xf32>
    %cst = arith.constant dense<0xFF800000> : vector<2x128xf32>
    %6 = vector.multi_reduction <maximumf>, %3, %cst [1] : vector<2x4x128xf32> to vector<2x128xf32>
    %7 = arith.maximumf %5, %6 : vector<2x128xf32>
    %c0_6 = arith.constant 0 : index
    %c0_7 = arith.constant 0 : index
    %c0_8 = arith.constant 0 : index
    %8 = vector.load %arg5[%c0_6, %c0_7, %c0_8] : memref<1x2x128xf32, #tpu.memory_space<vmem>>, vector<1x2x128xf32>
    %9 = vector.shape_cast %8 : vector<1x2x128xf32> to vector<2x128xf32>
    %10 = vector.shape_cast %7 : vector<2x128xf32> to vector<1x2x128xf32>
    tpu.vector_store %arg5[%c0_6, %c0_7, %c0_8], %10 {strides = array<i32>} : memref<1x2x128xf32, #tpu.memory_space<vmem>>, vector<1x2x128xf32>,
    return
  }
  func.func @transform_0(%arg0: i32, %arg1: i32, %arg2: i32, %arg3: i32) -> (i32, i32, i32) {
    %c1_i32 = arith.constant 1 : i32
    %0 = arith.muli %arg0, %c1_i32 : i32
    %1 = arith.addi %0, %arg3 : i32
    %c0_i32 = arith.constant 0 : i32
    %2 = arith.minsi %1, %c0_i32 : i32
    %c0_i32_0 = arith.constant 0 : i32
    return %arg1, %2, %arg2 : i32, i32, i32
  }
  func.func @transform_1(%arg0: i32, %arg1: i32, %arg2: i32, %arg3: i32) -> (i32, i32, i32) {
    %c0_i32 = arith.constant 0 : i32
    return %arg0, %arg1, %arg2 : i32, i32, i32
  }
}

</mosaic_0001>

<llo_original>
// kernel: squeeze.1
$region0: #{squeeze.1}
  %s0 = inlined_call_operand.vmem [shape: f32[1,2,128], index: 0, kind: input, shape index: {}]
  %s1 = inlined_call_operand.vmem [shape: f32[2,4,32], index: 1, kind: output, shape index: {}]
  $region1: #{squeeze.1} parent=0
    #allocation0 [shape = 'u8[8192]{0}', space=vmem, size = 0x2000, scoped, tag = 'scoped mem for output reshape']
    #allocation1 [shape = 'u8[4096]{0}', space=vmem, size = 0x1000, scoped, tag = 'scoped mem for input reshape']
    %s3 = sshllo.u32 0, 2
    %v4 = vld [vmem:[%s0] sm:%s3]
    %5 = vst [vmem:[#allocation1] sm:%s3] %v4
    %v6 = vld [vmem:[#allocation1] sm:$0x3]
    %vm7 = vcmask 261120
    %8 = vst.msk [vmem:[#allocation0] ss:$8 sm:$0x3] %vm7, %v6
    %v9 = vld [vmem:[#allocation1] sm:$0x3]
    %10 = vrot.lane.b32.xlu0 %v9, 96
    %v11 = vpop.permute.xlu0 %10
    %vm12 = vcmask 261120
    %s13 = scalar_lea.vmem [#allocation0], 1
    %14 = vst.msk [vmem:[%s13] ss:$8 sm:$0x3] %vm12, %v11
    %v15 = vld [vmem:[#allocation1] sm:$0x3]
    %16 = vrot.lane.b32.xlu0 %v15, 64
    %v17 = vpop.permute.xlu0 %16
    %vm18 = vcmask 261120
    %s19 = scalar_lea.vmem [#allocation0], 2
    %20 = vst.msk [vmem:[%s19] ss:$8 sm:$0x3] %vm18, %v17
    %v21 = vld [vmem:[#allocation1] sm:$0x3]
    %22 = vrot.lane.b32.xlu0 %v21, 32
    %v23 = vpop.permute.xlu0 %22
    %vm24 = vcmask 261120
    %s25 = scalar_lea.vmem [#allocation0], 3
    %26 = vst.msk [vmem:[%s25] ss:$8 sm:$0x3] %vm24, %v23
    %s28 = sshllo.u32 0, 4
    %v30 = vld [vmem:[#allocation0] sm:%s28]
    %s31 = sshllo.u32 0, 4
    %32 = vst [vmem:[%s1] sm:%s31] %v30
    %s33 = scalar_lea.vmem [#allocation0], 8
    %v34 = vld [vmem:[%s33] sm:%s28]
    %s35 = sshllo.u32 0, 4
    %s36 = scalar_lea.vmem %s1, 4
    %37 = vst [vmem:[%s36] sm:%s35] %v34

// kernel: _max_pool_jit.1
$region0: #{_max_pool_jit.1}
  #allocation0 [shape = 'u32[]', space=smem, size = 0x4, offset = 0x4, fixed_abs, tag = 'smem constant byte address 0x4 - core index']
  #allocation1 [shape = 'u32[144,128]{1,0:T(1,128)}', space=vmem, size = 0x12000, scoped, tag = 'internal scratch']
  %s0 = inlined_call_operand.vmem [shape: f32[2,4,128], index: 0, kind: input, shape index: {}]
  %s1 = inlined_call_operand.vmem [shape: f32[1,2,128], index: 1, kind: output, shape index: {}]
  %s2 = sld [smem:[#allocation0]]
  $region18: #{_max_pool_jit.1} parent=0
    _
  %s4 = ssub.s32 1, %s2
  %s5 = scalar_select 0, %s4, %s2
  // Predicated region
  $region2: #{_max_pool_jit.1} parent=0 // pred_check
    _
  $region3: #{_max_pool_jit.1} parent=0 // pred_check_branch
    %7 = sbr.rel (0) target = $region5
  $region4: #{_max_pool_jit.1} parent=0 // pred_region
    %s8 = sadd.s32 0, 0
    %p9 = scmp.lt.s32.totalorder %s8, 0
    %s10 = scalar_select %p9, %s8, 0
    %p11 = scmp.lt.s32.totalorder %s10, 0
    %s12 = scalar_select %p11, %s10, 0
    %s13 = smul.addr %s12, 4
    %s14 = scalar_lea.vmem %s0, %s13
    %s15 = sadd.s32 0, 0
    %p16 = scmp.lt.s32.totalorder %s15, 0
    %s17 = scalar_select %p16, %s15, 0
  $region5: #{_max_pool_jit.1} parent=0 // pred_fallthru
    _
  %s18 = sadd.s32 0, 0
  %p19 = scmp.lt.s32.totalorder %s18, 0
  %s20 = scalar_select %p19, %s18, 0
  %p21 = scmp.lt.s32.totalorder %s20, 0
  %s22 = scalar_select %p21, %s20, 0
  %s23 = smul.addr %s22, 4
  %s24 = scalar_lea.vmem %s0, %s23
  %s25 = sadd.s32 0, 0
  %p26 = scmp.lt.s32.totalorder %s25, 0
  %s27 = scalar_select %p26, %s25, 0
  %p28 = scmp.lt.s32.totalorder %s27, 0
  %s29 = scalar_select %p28, %s27, 0
  %s30 = smul.addr %s29, 4
  %s31 = scalar_lea.vmem %s0, %s30
  %s32 = sadd.s32 0, 0
  %p33 = scmp.lt.s32.totalorder %s32, 0
  %s34 = scalar_select %p33, %s32, 0
  %p35 = scmp.eq.s32.totalorder 0, 0
  // Predicated region
  $region6: #{_max_pool_jit.1} parent=0 // pred_check
    %p36 = pneg %p35
  $region7: #{_max_pool_jit.1} parent=0 // pred_check_branch
    %38 = sbr.rel (%p36) target = $region9
  $region8: #{_max_pool_jit.1} parent=0 // pred_region
    %39 = vst [vmem:[%s1] sm:$0x3] -inf
  $region9: #{_max_pool_jit.1} parent=0 // pred_fallthru
    _
  %v40 = vld [vmem:[%s31] sm:$0xf]
  %v41 = vld [vmem:[%s31 + $0x4] sm:$0xf]
  %v42 = vld [vmem:[%s1] sm:$0x3]
  %vm43 = vcmask 1043456
  %v44 = vsel %vm43, %v40, -inf
  %v45 = vrot.slane %v44, 4
  %v46 = vmax.f32 %v44, %v45
  %v47 = vrot.slane %v46, 2
  %v48 = vmax.f32 %v46, %v47
  %v49 = vrot.slane %v48, 1
  %v50 = vmax.f32 %v48, %v49
  %v51 = vsel %vm43, %v41, -inf
  %v52 = vrot.slane %v51, 4
  %v53 = vmax.f32 %v51, %v52
  %v54 = vrot.slane %v53, 2
  %v55 = vmax.f32 %v53, %v54
  %v56 = vrot.slane %v55, 1
  %v57 = vmax.f32 %v55, %v56
  %vm60 = vcmask 1041409
  %v61 = vsel %vm60, %v57, %v50
  %v63 = vmax.f32 %v42, %v61
  %64 = vst [vmem:[%s1] sm:$0x3] %v63
  // Predicated region
  $region10: #{_max_pool_jit.1} parent=0 // pred_check
    _
  $region11: #{_max_pool_jit.1} parent=0 // pred_check_branch
    %66 = sbr.rel (0) target = $region13
  $region12: #{_max_pool_jit.1} parent=0 // pred_region
    _
  $region13: #{_max_pool_jit.1} parent=0 // pred_fallthru
    _
  // Predicated region
  $region14: #{_max_pool_jit.1} parent=0 // pred_check
    _
  $region15: #{_max_pool_jit.1} parent=0 // pred_check_branch
    %68 = sbr.rel (0) target = $region17
  $region16: #{_max_pool_jit.1} parent=0 // pred_region
    _
  $region17: #{_max_pool_jit.1} parent=0 // pred_fallthru
    _

</llo_original>
